<compile_context>
chip_gen: v7x
topology: tpu7x:2x2x1
jax: 0.10.0
libtpu: 0.0.40
codegen_flags: <defaults>
</compile_context>

<pallas_src>
import functools
import math

import jax
import jax.numpy as jnp
from jax.experimental import pallas as pl
from jax.experimental.pallas import tpu as pltpu


def _gelu_tanh(x):
    c = math.sqrt(2.0 / math.pi)
    return 0.5 * x * (1.0 + jnp.tanh(c * (x + 0.044715 * x * x * x)))


def _gelu_erf(x):
    return 0.5 * x * (1.0 + jax.lax.erf(x * (1.0 / math.sqrt(2.0))))


def _head_transform_kernel(x_ref, w_ref, b_ref, g_ref, beta_ref, o_ref, *, eps, act):
    # x_ref:  [TB, H]  row tile (pipelined, double-buffered over the grid)
    # w_ref:  [H, H]   pre-transposed dense weight [in, out] (resident, 1-buffered)
    # b_ref / g_ref / beta_ref: [1, H]  dense bias, LN gamma, LN beta (resident)
    # o_ref:  [TB, H]
    x = x_ref[...]
    w = w_ref[...]

    # dense(H -> H): plain (k, k) contraction on the MXU with f32 accumulation.
    h = jnp.dot(x, w, preferred_element_type=jnp.float32)            # [TB, H] f32
    h = h + b_ref[...].astype(jnp.float32)

    # Activation.
    if act == "gelu_erf":
        a = _gelu_erf(h)
    elif act == "relu":
        a = jnp.maximum(h, 0.0)
    else:  # "gelu_tanh" (default)
        a = _gelu_tanh(h)

    # LayerNorm over the hidden (lane) axis — one-pass statistics:
    #   var = E[a^2] - mean^2   (both reductions are independent -> shorter chain).
    mean = jnp.mean(a, axis=-1, keepdims=True)                        # [TB, 1]
    m2 = jnp.mean(a * a, axis=-1, keepdims=True)                      # [TB, 1]
    var = jnp.maximum(m2 - mean * mean, 0.0)
    inv = jax.lax.rsqrt(var + eps)
    y = (a - mean) * inv * g_ref[...].astype(jnp.float32) + beta_ref[...].astype(jnp.float32)

    o_ref[...] = y.astype(o_ref.dtype)


def _round_up(a, m):
    return (a + m - 1) // m * m


def bert_prediction_head_transform(
    hidden_states,
    weight_t,      # [H_in, H_out]: PyTorch weight transposed ONCE at param-load time
    bias,          # [H]
    ln_gamma,      # [H]
    ln_beta,       # [H]
    *,
    eps=1e-12,
    act="gelu_tanh",
    block_rows=None,
):
    """Fused dense + activation + LayerNorm. hidden_states: [..., H]."""
    orig_shape = hidden_states.shape
    H = orig_shape[-1]
    x = hidden_states.reshape(-1, H)
    N = x.shape[0]
    dsize = jnp.dtype(hidden_states.dtype).itemsize

    # Generation-friendly defaults: 256 rows for f32 (fits v5e's 16 MiB scoped
    # default), 512 for 16-bit I/O. v6e (128 MiB VMEM) can pass block_rows=1024.
    if block_rows is None:
        block_rows = 512 if dsize <= 2 else 256

    # Row tile: multiple of 8 sublanes; keep >=2 grid steps when possible so the
    # "parallel" axis can use both v7x TensorCores.
    tb = min(block_rows, _round_up(N, 8))
    if N >= 16:
        tb = min(tb, _round_up(pl.cdiv(N, 2), 8))
    tb = max(tb, 8)
    grid = (pl.cdiv(N, tb),)

    b2 = bias.reshape(1, H)
    g2 = ln_gamma.reshape(1, H)
    beta2 = ln_beta.reshape(1, H)

    w_bytes = H * H * jnp.dtype(weight_t.dtype).itemsize
    io_bytes = 2 * (2 * tb * H * dsize)        # x + out, double-buffered
    f32_scratch = 3 * tb * H * 4               # f32 intermediates headroom
    vmem_limit = int(1.25 * (w_bytes + io_bytes + f32_scratch)) + (2 << 20)
    vmem_limit = min(max(vmem_limit, 8 << 20), 48 << 20)

    cost = pl.CostEstimate(
        flops=2 * N * H * H + 12 * N * H,
        transcendentals=N * H + N,             # one tanh/erf per element + rsqrt per row
        bytes_accessed=2 * N * H * dsize + w_bytes + 3 * H * dsize,
    )

    out = pl.pallas_call(
        functools.partial(_head_transform_kernel, eps=eps, act=act),
        out_shape=jax.ShapeDtypeStruct((N, H), hidden_states.dtype),
        grid_spec=pl.GridSpec(
            grid=grid,
            in_specs=[
                pl.BlockSpec((tb, H), lambda i: (i, 0)),                                  # x (pipelined)
                pl.BlockSpec((H, H), lambda i: (0, 0), pipeline_mode=pl.Buffered(1)),     # weight (resident)
                pl.BlockSpec((1, H), lambda i: (0, 0), pipeline_mode=pl.Buffered(1)),     # bias
                pl.BlockSpec((1, H), lambda i: (0, 0), pipeline_mode=pl.Buffered(1)),     # LN gamma
                pl.BlockSpec((1, H), lambda i: (0, 0), pipeline_mode=pl.Buffered(1)),     # LN beta
            ],
            out_specs=pl.BlockSpec((tb, H), lambda i: (i, 0)),
        ),
        compiler_params=pltpu.CompilerParams(
            dimension_semantics=("parallel",),   # row blocks are independent
            vmem_limit_bytes=vmem_limit,
        ),
        cost_estimate=cost,
    )(x, weight_t, b2, g2, beta2)

    return out.reshape(orig_shape)


if __name__ == "__main__":
    # Small config consistent with the module: batch=2, seq=8, hidden_size=32.
    B, S, H = 2, 8, 32
    eps = 1e-12

    key = jax.random.PRNGKey(0)
    k_x, k_w, k_b, k_g, k_be = jax.random.split(key, 5)

    hidden_states = jax.random.normal(k_x, (B, S, H), dtype=jnp.float32)
    weight = jax.random.normal(k_w, (H, H), dtype=jnp.float32) * 0.02   # PyTorch [out, in]
    bias = jax.random.normal(k_b, (H,), dtype=jnp.float32) * 0.02
    ln_gamma = 1.0 + 0.1 * jax.random.normal(k_g, (H,), dtype=jnp.float32)
    ln_beta = 0.1 * jax.random.normal(k_be, (H,), dtype=jnp.float32)

    # Transpose once at "parameter-load" time (outside the per-step call).
    weight_t = jnp.transpose(weight)                                    # [in, out]

    out = bert_prediction_head_transform(
        hidden_states, weight_t, bias, ln_gamma, ln_beta, eps=eps
    )
    out = jax.block_until_ready(out)

    # Pure-JAX reference (same tanh-GELU; two-pass LayerNorm statistics).
    h_ref = (
        jnp.einsum(
            "bsh,oh->bso", hidden_states, weight, precision=jax.lax.Precision.HIGHEST
        )
        + bias
    )
    a_ref = _gelu_tanh(h_ref)
    mean = jnp.mean(a_ref, axis=-1, keepdims=True)
    var = jnp.mean((a_ref - mean) ** 2, axis=-1, keepdims=True)
    ref = (a_ref - mean) * jax.lax.rsqrt(var + eps) * ln_gamma + ln_beta

    assert out.shape == (B, S, H)
    assert jnp.allclose(out, ref, atol=1e-3, rtol=1e-3), float(jnp.max(jnp.abs(out - ref)))
    print("KERNEL_OK")
</pallas_src>

<mosaic_0001>
module attributes {stable_mosaic.version = 11 : i64} {
  func.func @_head_transform_kernel(%arg0: i32, %arg1: memref<8x32xf32, #tpu.memory_space<vmem>>, %arg2: memref<32x32xf32, #tpu.memory_space<vmem>>, %arg3: memref<1x32xf32, #tpu.memory_space<vmem>>, %arg4: memref<1x32xf32, #tpu.memory_space<vmem>>, %arg5: memref<1x32xf32, #tpu.memory_space<vmem>>, %arg6: memref<8x32xf32, #tpu.memory_space<vmem>>) attributes {dimension_semantics = [#tpu.dimension_semantics<parallel>], iteration_bounds = array<i64: 2>, scalar_prefetch = 0 : i64, scratch_operands = 0 : i64, tpu.core_type = #tpu.core_type<tc>, window_params = [{transform_indices = @transform_0, window_bounds = array<i64: 8, 32>}, {pipeline_mode = #tpu.pipeline_mode<synchronous>, transform_indices = @transform_1, window_bounds = array<i64: 32, 32>}, {pipeline_mode = #tpu.pipeline_mode<synchronous>, transform_indices = @transform_2, window_bounds = array<i64: 1, 32>}, {pipeline_mode = #tpu.pipeline_mode<synchronous>, transform_indices = @transform_3, window_bounds = array<i64: 1, 32>}, {pipeline_mode = #tpu.pipeline_mode<synchronous>, transform_indices = @transform_4, window_bounds = array<i64: 1, 32>}, {transform_indices = @transform_5, window_bounds = array<i64: 8, 32>}]} {
    %c0 = arith.constant 0 : index
    %c0_0 = arith.constant 0 : index
    %0 = vector.load %arg1[%c0, %c0_0] : memref<8x32xf32, #tpu.memory_space<vmem>>, vector<8x32xf32>
    %c0_1 = arith.constant 0 : index
    %c0_2 = arith.constant 0 : index
    %1 = vector.load %arg2[%c0_1, %c0_2] : memref<32x32xf32, #tpu.memory_space<vmem>>, vector<32x32xf32>
    %cst = arith.constant dense<0.000000e+00> : vector<8x32xf32>
    %2 = tpu.matmul %0, %1, %cst {dimension_numbers = #tpu.dot_dimension_numbers<[1], [0], [0], [1], [0, 0, 1, 1], [], []>} : vector<8x32xf32>, vector<32x32xf32>, vector<8x32xf32> -> vector<8x32xf32>
    %c0_3 = arith.constant 0 : index
    %c0_4 = arith.constant 0 : index
    %3 = vector.load %arg3[%c0_3, %c0_4] : memref<1x32xf32, #tpu.memory_space<vmem>>, vector<1x32xf32>
    %4 = vector.broadcast %3 : vector<1x32xf32> to vector<8x32xf32>
    %5 = arith.addf %2, %4 : vector<8x32xf32>
    %cst_5 = arith.constant 5.000000e-01 : f32
    %6 = vector.broadcast %cst_5 : f32 to vector<8x32xf32>
    %7 = arith.mulf %6, %5 : vector<8x32xf32>
    %cst_6 = arith.constant 4.471500e-02 : f32
    %8 = vector.broadcast %cst_6 : f32 to vector<8x32xf32>
    %9 = arith.mulf %8, %5 : vector<8x32xf32>
    %10 = arith.mulf %9, %5 : vector<8x32xf32>
    %11 = arith.mulf %10, %5 : vector<8x32xf32>
    %12 = arith.addf %5, %11 : vector<8x32xf32>
    %cst_7 = arith.constant 0.797884583 : f32
    %13 = vector.broadcast %cst_7 : f32 to vector<8x32xf32>
    %14 = arith.mulf %13, %12 : vector<8x32xf32>
    %15 = math.tanh %14 : vector<8x32xf32>
    %cst_8 = arith.constant 1.000000e+00 : f32
    %16 = vector.broadcast %cst_8 : f32 to vector<8x32xf32>
    %17 = arith.addf %16, %15 : vector<8x32xf32>
    %18 = arith.mulf %7, %17 : vector<8x32xf32>
    %cst_9 = arith.constant dense<0.000000e+00> : vector<8xf32>
    %19 = vector.multi_reduction <add>, %18, %cst_9 [1] : vector<8x32xf32> to vector<8xf32>
    %20 = vector.shape_cast %19 : vector<8xf32> to vector<8x1xf32>
    %cst_10 = arith.constant 3.200000e+01 : f32
    %21 = vector.broadcast %cst_10 : f32 to vector<8x1xf32>
    %22 = arith.divf %20, %21 : vector<8x1xf32>
    %23 = arith.mulf %18, %18 : vector<8x32xf32>
    %cst_11 = arith.constant dense<0.000000e+00> : vector<8xf32>
    %24 = vector.multi_reduction <add>, %23, %cst_11 [1] : vector<8x32xf32> to vector<8xf32>
    %25 = vector.shape_cast %24 : vector<8xf32> to vector<8x1xf32>
    %cst_12 = arith.constant 3.200000e+01 : f32
    %26 = vector.broadcast %cst_12 : f32 to vector<8x1xf32>
    %27 = arith.divf %25, %26 : vector<8x1xf32>
    %28 = arith.mulf %22, %22 : vector<8x1xf32>
    %29 = arith.subf %27, %28 : vector<8x1xf32>
    %cst_13 = arith.constant 0.000000e+00 : f32
    %30 = vector.broadcast %cst_13 : f32 to vector<8x1xf32>
    %31 = arith.maximumf %29, %30 : vector<8x1xf32>
    %cst_14 = arith.constant 9.99999996E-13 : f32
    %32 = vector.broadcast %cst_14 : f32 to vector<8x1xf32>
    %33 = arith.addf %31, %32 : vector<8x1xf32>
    %34 = math.rsqrt %33 : vector<8x1xf32>
    %35 = vector.broadcast %22 : vector<8x1xf32> to vector<8x32xf32>
    %36 = arith.subf %18, %35 : vector<8x32xf32>
    %37 = vector.broadcast %34 : vector<8x1xf32> to vector<8x32xf32>
    %38 = arith.mulf %36, %37 : vector<8x32xf32>
    %c0_15 = arith.constant 0 : index
    %c0_16 = arith.constant 0 : index
    %39 = vector.load %arg4[%c0_15, %c0_16] : memref<1x32xf32, #tpu.memory_space<vmem>>, vector<1x32xf32>
    %40 = vector.broadcast %39 : vector<1x32xf32> to vector<8x32xf32>
    %41 = arith.mulf %38, %40 : vector<8x32xf32>
    %c0_17 = arith.constant 0 : index
    %c0_18 = arith.constant 0 : index
    %42 = vector.load %arg5[%c0_17, %c0_18] : memref<1x32xf32, #tpu.memory_space<vmem>>, vector<1x32xf32>
    %43 = vector.broadcast %42 : vector<1x32xf32> to vector<8x32xf32>
    %44 = arith.addf %41, %43 : vector<8x32xf32>
    %c0_19 = arith.constant 0 : index
    %c0_20 = arith.constant 0 : index
    %45 = vector.load %arg6[%c0_19, %c0_20] : memref<8x32xf32, #tpu.memory_space<vmem>>, vector<8x32xf32>
    tpu.vector_store %arg6[%c0_19, %c0_20], %44 {strides = array<i32>} : memref<8x32xf32, #tpu.memory_space<vmem>>, vector<8x32xf32>,
    return
  }
  func.func @transform_0(%arg0: i32) -> (i32, i32) {
    %c0_i32 = arith.constant 0 : i32
    %c0_i32_0 = arith.constant 0 : i32
    return %arg0, %c0_i32 : i32, i32
  }
  func.func @transform_1(%arg0: i32) -> (i32, i32) {
    %c0_i32 = arith.constant 0 : i32
    %c0_i32_0 = arith.constant 0 : i32
    %c0_i32_1 = arith.constant 0 : i32
    return %c0_i32, %c0_i32_0 : i32, i32
  }
  func.func @transform_2(%arg0: i32) -> (i32, i32) {
    %c0_i32 = arith.constant 0 : i32
    %c0_i32_0 = arith.constant 0 : i32
    %c0_i32_1 = arith.constant 0 : i32
    return %c0_i32, %c0_i32_0 : i32, i32
  }
  func.func @transform_3(%arg0: i32) -> (i32, i32) {
    %c0_i32 = arith.constant 0 : i32
    %c0_i32_0 = arith.constant 0 : i32
    %c0_i32_1 = arith.constant 0 : i32
    return %c0_i32, %c0_i32_0 : i32, i32
  }
  func.func @transform_4(%arg0: i32) -> (i32, i32) {
    %c0_i32 = arith.constant 0 : i32
    %c0_i32_0 = arith.constant 0 : i32
    %c0_i32_1 = arith.constant 0 : i32
    return %c0_i32, %c0_i32_0 : i32, i32
  }
  func.func @transform_5(%arg0: i32) -> (i32, i32) {
    %c0_i32 = arith.constant 0 : i32
    %c0_i32_0 = arith.constant 0 : i32
    return %arg0, %c0_i32 : i32, i32
  }
}

</mosaic_0001>

<llo_original>
// kernel: tpu_custom_call.1
$region0: #{tpu_custom_call.1}
  #allocation0 [shape = 'u32[]', space=smem, size = 0x4, offset = 0x4, fixed_abs, tag = 'smem constant byte address 0x4 - core index']
  #allocation1 [shape = 'u32[144,128]{1,0:T(1,128)}', space=vmem, size = 0x12000, scoped, tag = 'internal scratch']
  %s0 = inlined_call_operand.hbm [shape: f32[16,32], index: 0, kind: input, shape index: {}]
  %s1 = inlined_call_operand.hbm [shape: f32[32,32], index: 1, kind: input, shape index: {}]
  %s2 = inlined_call_operand.vmem [shape: f32[1,32], index: 2, kind: input, shape index: {}]
  %s3 = inlined_call_operand.vmem [shape: f32[1,32], index: 3, kind: input, shape index: {}]
  %s4 = inlined_call_operand.vmem [shape: f32[1,32], index: 4, kind: input, shape index: {}]
  %s5 = inlined_call_operand.hbm [shape: f32[16,32], index: 5, kind: output, shape index: {}]
  %s6 = sld [smem:[#allocation0]]
  $region61: #{tpu_custom_call.1} parent=0
    _
  %s8 = ssub.s32 1, %s6
  %s9 = scalar_select 0, %s8, %s6
  $region1: #{tpu_custom_call.1} parent=0
    #allocation2 [shape = 'u8[8192]{0}', space=vmem, size = 0x2000, scoped, tag = 'input window, operand 0']
    #allocation3 [shape = 's32[2]{0}', space=sflag, size = 0x8, scoped, tag = 'scoped memory for tpu_custom_call.1']
    #allocation4 [shape = 's32[2]{0}', space=sflag, size = 0x8, scoped, tag = 'scoped memory for tpu_custom_call.1']
    #allocation5 [shape = 'u8[16384]{0}', space=vmem, size = 0x4000, scoped, tag = 'input window, operand 1, single buffered']
    #allocation6 [shape = 's32[1]{0}', space=sflag, size = 0x4, scoped, tag = 'scoped memory for tpu_custom_call.1']
    #allocation7 [shape = 'u8[8192]{0}', space=vmem, size = 0x2000, scoped, tag = 'output window, operand 0']
    %10 = vsyncpa [#allocation3], 0
    %s11 = scalar_lea.sflag [#allocation3], 1
    %12 = vsyncpa %s11, 0
    %13 = vsyncpa [#allocation6], 0
    %14 = vsyncpa [#allocation4], 0
    %s15 = scalar_lea.sflag [#allocation4], 1
    %16 = vsyncpa %s15, 0
    loop: start=0, step=1, limit=4
    $region2: #{tpu_custom_call.1} parent=1 // loop_pre_header
      _
    $region3: #{tpu_custom_call.1} parent=1 // loop_header
      %s18 = sphi 0, %s22
      %p19 = scmp.ge.s32.totalorder %s18, 4
      %s28 = sphi 0, %s30
      %s31 = sphi 0, %s28
      %s32 = sphi 0, %s31
      %s48 = sphi 0, %s32
      %s52 = sphi 0, %s52
      %s54 = sphi 0, %s52
      %s55 = sphi 0, %s54
      %s69 = sphi 0, %s55
      %s73 = sphi 0, %s73
      %s75 = sphi 0, %s73
      %s76 = sphi 0, %s75
      %s90 = sphi 0, %s76
      %s94 = sphi 0, %s94
      %s96 = sphi 0, %s94
      %s97 = sphi 0, %s96
      %s111 = sphi 0, %s97
      %s115 = sphi 0, %s115
      %s117 = sphi 0, %s115
      %s118 = sphi 0, %s117
      %s132 = sphi 0, %s118
      %s138 = sphi 0, %s140
      %s141 = sphi 0, %s138
      %s142 = sphi 0, %s141
      %s158 = sphi 0, %s142
    $region4: #{tpu_custom_call.1} parent=1 // loop_header_branch
      %21 = sbr.rel (%p19) target = $region8
    $region5: #{tpu_custom_call.1} parent=1 // loop_body
      %s23 = ssub.s32 %s18, 1
      %s24 = ssub.s32 %s18, 2
      %s25 = sadd.s32 %s18, 1
      %s26 = ssub.s32 %s18, %s25
      %p27 = scmp.eq.s32.totalorder %s26, 0
      %s29 = sadd.s32 %s28, 1
      %s30 = scalar_select %p27, %s28, %s29
      %p33 = pneg %p27
      %p34 = scmp.eq.s32.totalorder %s18, 1
      %p35 = por %p33, %p34
      %p36 = scmp.ne.s32.totalorder %s28, %s31
      %p37 = scmp.eq.s32.totalorder %s18, 0
      %p38 = por %p36, %p37
      %p39 = scmp.ne.s32.totalorder %s28, %s31
      %p40 = scmp.eq.s32.totalorder %s23, 1
      %p41 = por %p39, %p40
      %p42 = scmp.ne.s32.totalorder %s31, %s32
      %p43 = scmp.eq.s32.totalorder %s23, 0
      %p44 = por %p42, %p43
      %p45 = scmp.ne.s32.totalorder %s31, %s32
      %p46 = scmp.eq.s32.totalorder %s24, 1
      %p47 = por %p45, %p46
      %p49 = scmp.ne.s32.totalorder %s32, %s48
      %p50 = scmp.eq.s32.totalorder %s24, 0
      %p51 = por %p49, %p50
      %s53 = sadd.s32 %s52, 1
      %p56 = scmp.eq.s32.totalorder %s18, 1
      %p57 = scmp.ne.s32.totalorder %s52, %s54
      %p58 = scmp.eq.s32.totalorder %s18, 0
      %p59 = por %p57, %p58
      %p60 = scmp.ne.s32.totalorder %s52, %s54
      %p61 = scmp.eq.s32.totalorder %s23, 1
      %p62 = por %p60, %p61
      %p63 = scmp.ne.s32.totalorder %s54, %s55
      %p64 = scmp.eq.s32.totalorder %s23, 0
      %p65 = por %p63, %p64
      %p66 = scmp.ne.s32.totalorder %s54, %s55
      %p67 = scmp.eq.s32.totalorder %s24, 1
      %p68 = por %p66, %p67
      %p70 = scmp.ne.s32.totalorder %s55, %s69
      %p71 = scmp.eq.s32.totalorder %s24, 0
      %p72 = por %p70, %p71
      %s74 = sadd.s32 %s73, 1
      %p77 = scmp.eq.s32.totalorder %s18, 1
      %p78 = scmp.ne.s32.totalorder %s73, %s75
      %p79 = scmp.eq.s32.totalorder %s18, 0
      %p80 = por %p78, %p79
      %p81 = scmp.ne.s32.totalorder %s73, %s75
      %p82 = scmp.eq.s32.totalorder %s23, 1
      %p83 = por %p81, %p82
      %p84 = scmp.ne.s32.totalorder %s75, %s76
      %p85 = scmp.eq.s32.totalorder %s23, 0
      %p86 = por %p84, %p85
      %p87 = scmp.ne.s32.totalorder %s75, %s76
      %p88 = scmp.eq.s32.totalorder %s24, 1
      %p89 = por %p87, %p88
      %p91 = scmp.ne.s32.totalorder %s76, %s90
      %p92 = scmp.eq.s32.totalorder %s24, 0
      %p93 = por %p91, %p92
      %s95 = sadd.s32 %s94, 1
      %p98 = scmp.eq.s32.totalorder %s18, 1
      %p99 = scmp.ne.s32.totalorder %s94, %s96
      %p100 = scmp.eq.s32.totalorder %s18, 0
      %p101 = por %p99, %p100
      %p102 = scmp.ne.s32.totalorder %s94, %s96
      %p103 = scmp.eq.s32.totalorder %s23, 1
      %p104 = por %p102, %p103
      %p105 = scmp.ne.s32.totalorder %s96, %s97
      %p106 = scmp.eq.s32.totalorder %s23, 0
      %p107 = por %p105, %p106
      %p108 = scmp.ne.s32.totalorder %s96, %s97
      %p109 = scmp.eq.s32.totalorder %s24, 1
      %p110 = por %p108, %p109
      %p112 = scmp.ne.s32.totalorder %s97, %s111
      %p113 = scmp.eq.s32.totalorder %s24, 0
      %p114 = por %p112, %p113
      %s116 = sadd.s32 %s115, 1
      %p119 = scmp.eq.s32.totalorder %s18, 1
      %p120 = scmp.ne.s32.totalorder %s115, %s117
      %p121 = scmp.eq.s32.totalorder %s18, 0
      %p122 = por %p120, %p121
      %p123 = scmp.ne.s32.totalorder %s115, %s117
      %p124 = scmp.eq.s32.totalorder %s23, 1
      %p125 = por %p123, %p124
      %p126 = scmp.ne.s32.totalorder %s117, %s118
      %p127 = scmp.eq.s32.totalorder %s23, 0
      %p128 = por %p126, %p127
      %p129 = scmp.ne.s32.totalorder %s117, %s118
      %p130 = scmp.eq.s32.totalorder %s24, 1
      %p131 = por %p129, %p130
      %p133 = scmp.ne.s32.totalorder %s118, %s132
      %p134 = scmp.eq.s32.totalorder %s24, 0
      %p135 = por %p133, %p134
      %s136 = ssub.s32 %s18, %s25
      %p137 = scmp.eq.s32.totalorder %s136, 0
      %s139 = sadd.s32 %s138, 1
      %s140 = scalar_select %p137, %s138, %s139
      %p143 = pneg %p137
      %p144 = scmp.eq.s32.totalorder %s18, 1
      %p145 = por %p143, %p144
      %p146 = scmp.ne.s32.totalorder %s138, %s141
      %p147 = scmp.eq.s32.totalorder %s18, 0
      %p148 = por %p146, %p147
      %p149 = scmp.ne.s32.totalorder %s138, %s141
      %p150 = scmp.eq.s32.totalorder %s23, 1
      %p151 = por %p149, %p150
      %p152 = scmp.ne.s32.totalorder %s141, %s142
      %p153 = scmp.eq.s32.totalorder %s23, 0
      %p154 = por %p152, %p153
      %p155 = scmp.ne.s32.totalorder %s141, %s142
      %p156 = scmp.eq.s32.totalorder %s24, 1
      %p157 = por %p155, %p156
      %p159 = scmp.ne.s32.totalorder %s142, %s158
      %p160 = scmp.eq.s32.totalorder %s24, 0
      %p161 = por %p159, %p160
      %p162 = scmp.le.s32.totalorder 1, %s18
      %p163 = scmp.lt.s32.totalorder %s18, 3
      %p164 = pnand %p162, %p163
      %p165 = pneg %p164
      // Predicated region
      $region9: #{tpu_custom_call.1} parent=5 // pred_check
        _
      $region10: #{tpu_custom_call.1} parent=5 // pred_check_branch
        %167 = sbr.rel (%p164) target = $region12
      $region11: #{tpu_custom_call.1} parent=5 // pred_region
        %s168 = ssub.s32 %s18, 1
        // Predicated region
        $region13: #{tpu_custom_call.1} parent=11 // pred_check
          %p169 = pneg %p65
        $region14: #{tpu_custom_call.1} parent=11 // pred_check_branch
          %171 = sbr.rel (%p169) target = $region16
        $region15: #{tpu_custom_call.1} parent=11 // pred_region
          %s173 = ssub.s32 512, 512
          %174 = vsyncadd [#allocation6], %s173
          %s175 = sshll.u32 [#allocation5], 4
          %s176 = int_to_ptr.vmem [resolvable:$true] %s175
          %181 = dma.hbm_to_vmem [thread:$0]  %s1, 512, %s176, [#allocation6], 128, 128, 8
        $region16: #{tpu_custom_call.1} parent=11 // pred_fallthru
          _
        // Predicated region
        $region17: #{tpu_custom_call.1} parent=11 // pred_check
          %p182 = pneg %p86
        $region18: #{tpu_custom_call.1} parent=11 // pred_check_branch
          %184 = sbr.rel (%p182) target = $region20
        $region19: #{tpu_custom_call.1} parent=11 // pred_region
          _
        $region20: #{tpu_custom_call.1} parent=11 // pred_fallthru
          _
        // Predicated region
        $region21: #{tpu_custom_call.1} parent=11 // pred_check
          %p185 = pneg %p107
        $region22: #{tpu_custom_call.1} parent=11 // pred_check_branch
          %187 = sbr.rel (%p185) target = $region24
        $region23: #{tpu_custom_call.1} parent=11 // pred_region
          _
        $region24: #{tpu_custom_call.1} parent=11 // pred_fallthru
          _
        // Predicated region
        $region25: #{tpu_custom_call.1} parent=11 // pred_check
          %p188 = pneg %p128
        $region26: #{tpu_custom_call.1} parent=11 // pred_check_branch
          %190 = sbr.rel (%p188) target = $region28
        $region27: #{tpu_custom_call.1} parent=11 // pred_region
          _
        $region28: #{tpu_custom_call.1} parent=11 // pred_fallthru
          _
      $region12: #{tpu_custom_call.1} parent=5 // pred_fallthru
        _
      %p191 = scmp.lt.s32.totalorder %s18, 2
      // Predicated region
      $region29: #{tpu_custom_call.1} parent=5 // pred_check
        %p192 = pneg %p191
      $region30: #{tpu_custom_call.1} parent=5 // pred_check_branch
        %194 = sbr.rel (%p192) target = $region32
      $region31: #{tpu_custom_call.1} parent=5 // pred_region
        // Predicated region
        $region33: #{tpu_custom_call.1} parent=31 // pred_check
          %p195 = pneg %p38
        $region34: #{tpu_custom_call.1} parent=31 // pred_check_branch
          %197 = sbr.rel (%p195) target = $region36
        $region35: #{tpu_custom_call.1} parent=31 // pred_region
          %s198 = sand.u32 %s28, 1
          %s199 = scalar_lea.sflag [#allocation3], %s198
          %s200 = sand.u32 %s28, 1
          %s201 = smul.addr %s200, 8
          %s202 = scalar_lea.vmem [#allocation2], %s201
          %s204 = ssub.s32 128, 128
          %205 = vsyncadd %s199, %s204
          %s206 = smul.addr %s18, 128
          %s207 = scalar_lea.hbm %s0, %s206
          %s209 = sshll.u32 %s202, 4
          %s210 = int_to_ptr.vmem [resolvable:$true] %s209
          %212 = dma.hbm_to_vmem [thread:$0]  %s207, 128, %s210, %s199
        $region36: #{tpu_custom_call.1} parent=31 // pred_fallthru
          _
      $region32: #{tpu_custom_call.1} parent=5 // pred_fallthru
        _
      %p213 = scmp.le.s32.totalorder 1, %s18
      %p214 = scmp.lt.s32.totalorder %s18, 3
      %p215 = pnand %p213, %p214
      %p216 = pneg %p215
      // Predicated region
      $region37: #{tpu_custom_call.1} parent=5 // pred_check
        _
      $region38: #{tpu_custom_call.1} parent=5 // pred_check_branch
        %218 = sbr.rel (%p215) target = $region40
      $region39: #{tpu_custom_call.1} parent=5 // pred_region
        %s219 = ssub.s32 %s18, 1
        %s220 = sand.u32 %s31, 1
        %s221 = scalar_lea.sflag [#allocation3], %s220
        %s222 = sand.u32 %s31, 1
        %s223 = smul.addr %s222, 8
        %s224 = scalar_lea.vmem [#allocation2], %s223
        // Predicated region
        $region41: #{tpu_custom_call.1} parent=39 // pred_check
          %p225 = pneg %p44
        $region42: #{tpu_custom_call.1} parent=39 // pred_check_branch
          %227 = sbr.rel (%p225) target = $region44
        $region43: #{tpu_custom_call.1} parent=39 // pred_region
          %228 = dma.done %s221, 128
        $region44: #{tpu_custom_call.1} parent=39 // pred_fallthru
          _
        // Predicated region
        $region45: #{tpu_custom_call.1} parent=39 // pred_check
          %p229 = pneg %p65
        $region46: #{tpu_custom_call.1} parent=39 // pred_check_branch
          %231 = sbr.rel (%p229) target = $region48
        $region47: #{tpu_custom_call.1} parent=39 // pred_region
          %232 = dma.done [#allocation6], 512
        $region48: #{tpu_custom_call.1} parent=39 // pred_fallthru
          _
        %s233 = sand.u32 %s31, 1
        %s234 = scalar_lea.sflag [#allocation3], %s233
        %s235 = sand.u32 %s31, 1
        %s236 = smul.addr %s235, 8
        %s237 = scalar_lea.vmem [#allocation2], %s236
        %p238 = pneg %p44
        %p239 = pneg %p41
        %p240 = pneg %p65
        %p241 = pneg %p62
        %p242 = pneg %p86
        %p243 = pneg %p83
        %p244 = pneg %p107
        %p245 = pneg %p104
        %p246 = pneg %p128
        %p247 = pneg %p125
        %p248 = pneg %p154
        %p249 = pneg %p151
        %s250 = sand.u32 %s141, 1
        %s251 = scalar_lea.sflag [#allocation4], %s250
        %s252 = sand.u32 %s141, 1
        %s253 = smul.addr %s252, 8
        %s254 = scalar_lea.vmem [#allocation7], %s253
        %v255 = vld [vmem:[%s224] sm:$0xff]
        %v256 = vld [vmem:[#allocation5] sm:$0xff]
        %v257 = vld [vmem:[#allocation5 + $0x8] sm:$0xff]
        %v258 = vld [vmem:[#allocation5 + $0x10] sm:$0xff]
        %v259 = vld [vmem:[#allocation5 + $0x18] sm:$0xff]
        %v260 = vld [vmem:[%s2] sm:$0x1]
        %v262 = vlaneseq
        %v263 = vshrl.u32 %v262, 7
        %v264 = vsub.s32 0, %v263
        %v265 = vrot.slane %v260, %v264
        %vm267 = vcmask 261120
        %v269 = vsel %vm267, %v255, 0
        %271 = vmatprep.subr.mxu0 0.0
        %272 = vmatpush1.msra.mxu0 %v256
        %273 = vmatprep.subr.mxu0 0.0
        %274 = vmatpush1.msra.mxu0 %v257
        %275 = vmatprep.subr.mxu0 0.0
        %276 = vmatpush1.msra.mxu0 %v258
        %277 = vmatprep.subr.mxu0 0.0
        %278 = vmatpush1.msra.mxu0 %v259
        %279 = vmatprep.subr.mxu0 0.0
        %280 = vmatpush1.msra.mxu0 0.0
        %281 = vmatprep.subr.mxu0 0.0
        %282 = vmatpush1.msra.mxu0 0.0
        %283 = vmatprep.subr.mxu0 0.0
        %284 = vmatpush1.msra.mxu0 0.0
        %285 = vmatprep.subr.mxu0 0.0
        %286 = vmatpush1.msra.mxu0 0.0
        %287 = vmatprep.subr.mxu0 0.0
        %288 = vmatpush1.msra.mxu0 0.0
        %289 = vmatprep.subr.mxu0 0.0
        %290 = vmatpush1.msra.mxu0 0.0
        %291 = vmatprep.subr.mxu0 0.0
        %292 = vmatpush1.msra.mxu0 0.0
        %293 = vmatprep.subr.mxu0 0.0
        %294 = vmatpush1.msra.mxu0 0.0
        %295 = vmatprep.subr.mxu0 0.0
        %296 = vmatpush1.msra.mxu0 0.0
        %297 = vmatprep.subr.mxu0 0.0
        %298 = vmatpush1.msra.mxu0 0.0
        %299 = vmatprep.subr.mxu0 0.0
        %300 = vmatpush1.msra.mxu0 0.0
        %301 = vmatprep.subr.mxu0 0.0
        %302 = vmatpush1.msra.mxu0 0.0
        %303 = vmatprep.subr.mxu0 0.0
        %304 = vmatpush1.msra.mxu0 0.0
        %305 = vmatprep.subr.mxu0 0.0
        %306 = vmatpush1.msra.mxu0 0.0
        %307 = vmatprep.subr.mxu0 0.0
        %308 = vmatpush1.msra.mxu0 0.0
        %309 = vmatprep.subr.mxu0 0.0
        %310 = vmatpush1.msra.mxu0 0.0
        %311 = vmatprep.subr.mxu0 0.0
        %312 = vmatpush1.msra.mxu0 0.0
        %313 = vmatprep.subr.mxu0 0.0
        %314 = vmatpush1.msra.mxu0 0.0
        %315 = vmatprep.subr.mxu0 0.0
        %316 = vmatpush1.msra.mxu0 0.0
        %317 = vmatprep.subr.mxu0 0.0
        %318 = vmatpush1.msra.mxu0 0.0
        %319 = vmatprep.subr.mxu0 0.0
        %320 = vmatpush1.msra.mxu0 0.0
        %321 = vmatprep.subr.mxu0 0.0
        %322 = vmatpush1.msra.mxu0 0.0
        %323 = vmatprep.subr.mxu0 0.0
        %324 = vmatpush1.msra.mxu0 0.0
        %325 = vmatprep.subr.mxu0 0.0
        %326 = vmatpush1.msra.mxu0 0.0
        %327 = vmatprep.subr.mxu0 0.0
        %328 = vmatpush1.msra.mxu0 0.0
        %329 = vmatprep.subr.mxu0 0.0
        %330 = vmatpush1.msra.mxu0 0.0
        %331 = vmatprep.subr.mxu0 0.0
        %332 = vmatpush1.msra.mxu0 0.0
        %333 = vmatprep.subr.mxu0 0.0
        %334 = vmatpush1.msra.mxu0 0.0
        %335 = vmatprep.mubr.f32.mxu0 0.0
        %336 = vmatmul.mubr.f32.gmra.mrb[0].mxu0 %v269
        %v337 = vpop.f32.mrb[0].mxu0
        %v338 = vadd.f32 %v265, %v337
        %v339 = vpop.f32.mrb[0].mxu0
        %340 = vdwg.mxu0
        %v341 = vmul.f32 %v338, 0.5
        %v342 = vmul.f32 %v338, 0.044715
        %v343 = vmul.f32 %v342, %v338
        %v344 = vmul.f32 %v343, %v338
        %v345 = vadd.f32 %v338, %v344
        %v346 = vmul.f32 %v345, 0.7978846
        %v347 = vtanh.pop %v346
        %v348 = vadd.f32 %v347, 1.0
        %v349 = vmul.f32 %v341, %v348
        %v350 = vsel %vm267, %v349, 0.0
        %351 = vadd.xlane.f32.xlu0 %v350
        %v352 = vpop.xlane.xlu0 %351
        %v353 = vrcp.pop 32.0
        %v354 = vmul.f32 %v352, %v353
        %v355 = vmul.f32 %v349, %v349
        %v356 = vsel %vm267, %v355, 0.0
        %357 = vadd.xlane.f32.xlu0 %v356
        %v358 = vpop.xlane.xlu0 %357
        %v359 = vmul.f32 %v358, %v353
        %v360 = vmul.f32 %v354, %v354
        %v361 = vsub.f32 %v359, %v360
        %v362 = vmax.f32 %v361, 0.0
        %v363 = vadd.f32 %v362, 1e-12
        %v364 = vrsqrt.pop %v363
        %v365 = vsub.f32 %v349, %v354
        %v366 = vmul.f32 %v365, %v364
        %v367 = vld [vmem:[%s3] sm:$0x1]
        %v369 = vlaneseq
        %v370 = vshrl.u32 %v369, 7
        %v371 = vsub.s32 0, %v370
        %v372 = vrot.slane %v367, %v371
        %v374 = vmul.f32 %v366, %v372
        %v375 = vld [vmem:[%s4] sm:$0x1]
        %v377 = vlaneseq
        %v378 = vshrl.u32 %v377, 7
        %v379 = vsub.s32 0, %v378
        %v380 = vrot.slane %v375, %v379
        %v382 = vadd.f32 %v374, %v380
        %383 = vst.msk [vmem:[%s254] sm:$0xff] %vm267, %v382
        %s384 = sand.u32 %s141, 1
        %s385 = scalar_lea.sflag [#allocation4], %s384
        %s386 = sand.u32 %s141, 1
        %s387 = smul.addr %s386, 8
        %s388 = scalar_lea.vmem [#allocation7], %s387
        // Predicated region
        $region49: #{tpu_custom_call.1} parent=39 // pred_check
          %p389 = pneg %p151
        $region50: #{tpu_custom_call.1} parent=39 // pred_check_branch
          %391 = sbr.rel (%p389) target = $region52
        $region51: #{tpu_custom_call.1} parent=39 // pred_region
          %s393 = ssub.s32 128, 128
          %394 = vsyncadd %s385, %s393
          %s395 = smul.addr %s23, 128
          %s396 = scalar_lea.hbm %s5, %s395
          %s398 = sshll.u32 %s388, 4
          %s399 = int_to_ptr.vmem [resolvable:$true] %s398
          %401 = dma.vmem_to_hbm [thread:$0]  %s399, 128, %s396, %s385
        $region52: #{tpu_custom_call.1} parent=39 // pred_fallthru
          _
      $region40: #{tpu_custom_call.1} parent=5 // pred_fallthru
        _
      %p402 = scmp.le.s32.totalorder 2, %s18
      // Predicated region
      $region53: #{tpu_custom_call.1} parent=5 // pred_check
        %p403 = pneg %p402
      $region54: #{tpu_custom_call.1} parent=5 // pred_check_branch
        %405 = sbr.rel (%p403) target = $region56
      $region55: #{tpu_custom_call.1} parent=5 // pred_region
        %s406 = ssub.s32 %s18, 2
        // Predicated region
        $region57: #{tpu_custom_call.1} parent=55 // pred_check
          %p407 = pneg %p157
        $region58: #{tpu_custom_call.1} parent=55 // pred_check_branch
          %409 = sbr.rel (%p407) target = $region60
        $region59: #{tpu_custom_call.1} parent=55 // pred_region
          %s410 = sand.u32 %s142, 1
          %s411 = scalar_lea.sflag [#allocation4], %s410
          %s412 = sand.u32 %s142, 1
          %s413 = smul.addr %s412, 8
          %s414 = scalar_lea.vmem [#allocation7], %s413
          %415 = dma.done %s411, 128
        $region60: #{tpu_custom_call.1} parent=55 // pred_fallthru
          _
      $region56: #{tpu_custom_call.1} parent=5 // pred_fallthru
        _
    $region6: #{tpu_custom_call.1} parent=1 // loop_footer
      %s22 = sadd.s32 1, %s18
    $region7: #{tpu_custom_call.1} parent=1 // loop_footer_branch
      %17 = sbr.rel target = $region3
    $region8: #{tpu_custom_call.1} parent=1 // loop_exit
      _
    %416 = vsyncpa [#allocation3], 1
    %s417 = scalar_lea.sflag [#allocation3], 1
    %418 = vsyncpa %s417, 1
    %419 = vsyncpa [#allocation6], 1
    %420 = vsyncpa [#allocation4], 1
    %s421 = scalar_lea.sflag [#allocation4], 1
    %422 = vsyncpa %s421, 1

</llo_original>
